<compile_context>
chip_gen: v5e
topology: v5e:2x2
jax: 0.10.0
libtpu: 0.0.40
codegen_flags: <defaults>
</compile_context>

<pallas_src>
import functools
import math

import jax
import jax.numpy as jnp
from jax.experimental import pallas as pl
from jax.experimental.pallas import tpu as pltpu

_LANE = 128
_VMEM_LIMIT_BYTES = 48 * 1024 * 1024   # <= v7x scoped ceiling, > 32 MiB default on v5e/v6e
_VMEM_TILE_BUDGET = 40 * 1024 * 1024   # leave headroom for compiler scratch


def _round_up(x, m):
    return (x + m - 1) // m * m


def _cdiv(a, b):
    return -(-a // b)


def _decoder_kernel(x_ref, w1_ref, b1_ref, w2_ref, out_ref):
    # x_ref  : (TILE_M, d_in)      f32   encoder_out rows (one M tile)
    # w1_ref : (d_in, hidden_p)    bf16  non_linear weight, transposed, hidden zero-padded
    # b1_ref : (1, hidden_p)       f32   non_linear bias, zero-padded
    # w2_ref : (hidden_p, label_p) bf16  linear weight, transposed + zero-padded
    # out_ref: (TILE_M, label_p)   out_dtype
    x = x_ref[...].astype(jnp.bfloat16)          # fused f32->bf16 cast (VPU, hidden under DMA)
    h = jnp.dot(x, w1_ref[...], preferred_element_type=jnp.float32)
    h = jnp.tanh(h + b1_ref[...])                # bias + tanh in f32
    # dropout: identity (eval mode)
    h = h.astype(jnp.bfloat16)
    out = jnp.dot(h, w2_ref[...], preferred_element_type=jnp.float32)
    out_ref[...] = out.astype(out_ref.dtype)


def prepare_decoder_params(w_nonlinear, b_nonlinear, w_linear):
    """One-time parameter prep (call once at init, OUTSIDE the hot path).

    w_nonlinear : (hidden_size, 2*rnn_hidden_dim)  PyTorch (out, in) layout
    b_nonlinear : (hidden_size,)
    w_linear    : (label_size, hidden_size)        PyTorch (out, in) layout

    Returns (w1_p, b1_p, w2_p): transposed to (in, out); hidden/label dims
    zero-padded to 128 multiples (d_in deliberately NOT padded); matmul
    weights cast to bf16, bias kept f32.
    """
    hidden, d_in = w_nonlinear.shape
    label = w_linear.shape[0]
    hidden_p = _round_up(hidden, _LANE)
    label_p = _round_up(label, _LANE)

    w1_p = jnp.zeros((d_in, hidden_p), jnp.float32)
    w1_p = w1_p.at[:, :hidden].set(w_nonlinear.T).astype(jnp.bfloat16)
    b1_p = jnp.zeros((1, hidden_p), jnp.float32)
    b1_p = b1_p.at[0, :hidden].set(b_nonlinear)
    w2_p = jnp.zeros((hidden_p, label_p), jnp.float32)
    w2_p = w2_p.at[:hidden, :label].set(w_linear.T).astype(jnp.bfloat16)
    return w1_p, b1_p, w2_p


def _select_tile_m(m, d_in, hidden_p, label_p, out_bytes,
                   single_buffer_weights, budget_bytes):
    """Largest M tile fitting the VMEM budget, with >=2 grid steps if possible."""
    weight_bufs = 1 if single_buffer_weights else 2
    weight_bytes = weight_bufs * (
        d_in * hidden_p * 2 + hidden_p * label_p * 2 + hidden_p * 4)
    # Per-M-row VMEM: x (f32, double-buffered) + out (double-buffered)
    # + hidden intermediate in f32 and bf16 (compiler scratch, single copy).
    per_row = 2 * d_in * 4 + 2 * label_p * out_bytes + hidden_p * 6
    avail = budget_bytes - weight_bytes
    tile_m = min(2048, max(16, avail // max(per_row, 1)))
    tile_m = max(16, (tile_m // 16) * 16)      # multiple of 16 (bf16 sublane pair)
    tile_m = min(tile_m, _round_up(m, 16))     # never bigger than the problem
    # Ensure >= 2 grid steps when possible so the "parallel" M axis shards
    # across both v7x TensorCores (neutral on single-TC v5e/v6e).
    while tile_m > 16 and _cdiv(m, tile_m) < 2:
        tile_m = max(16, _round_up(tile_m // 2, 16))
    return tile_m


@functools.partial(
    jax.jit,
    static_argnames=("batch", "seq", "label", "tile_m", "out_dtype",
                     "single_buffer_weights"))
def decoder_forward(encoder_out, w1_p, b1_p, w2_p, *, batch, seq, label,
                    tile_m=None, out_dtype=jnp.float32,
                    single_buffer_weights=True):
    """Replicates Decoder.forward (inference).

    encoder_out : (batch, seq, 2*rnn_hidden_dim) float32
    w1_p/b1_p/w2_p : outputs of prepare_decoder_params (pre-transposed/padded)
    Returns:
      decoder_out     : (batch*seq, label)
      decoder_out_acc : (batch, seq, label)
    """
    m = batch * seq
    d_in = encoder_out.shape[-1]
    d_in_w, hidden_p = w1_p.shape
    label_p = w2_p.shape[1]
    assert d_in_w == d_in, "w1_p must be prepared with K == encoder feature dim"

    out_bytes = jnp.dtype(out_dtype).itemsize
    if tile_m is None:
        tile_m = _select_tile_m(m, d_in, hidden_p, label_p, out_bytes,
                                single_buffer_weights, _VMEM_TILE_BUDGET)
    num_tiles = _cdiv(m, tile_m)

    # Stream f32 rows directly; the bf16 cast happens inside the kernel.
    x = encoder_out.reshape(m, d_in)

    flops = 2 * m * (d_in * hidden_p + hidden_p * label_p)
    bytes_accessed = (
        m * d_in * 4                # x (f32)
        + d_in * hidden_p * 2       # w1 (bf16)
        + hidden_p * label_p * 2    # w2 (bf16)
        + hidden_p * 4              # bias (f32)
        + m * label_p * out_bytes)  # out
    cost = pl.CostEstimate(flops=flops, transcendentals=m * hidden_p,
                           bytes_accessed=bytes_accessed)

    def _resident(shape):
        # Constant index_map -> block never changes across the M grid.
        if single_buffer_weights:
            return pl.BlockSpec(shape, lambda i: (0, 0),
                                pipeline_mode=pl.Buffered(1))
        return pl.BlockSpec(shape, lambda i: (0, 0))

    out = pl.pallas_call(
        _decoder_kernel,
        out_shape=jax.ShapeDtypeStruct((m, label_p), out_dtype),
        grid_spec=pl.GridSpec(
            grid=(num_tiles,),
            in_specs=[
                pl.BlockSpec((tile_m, d_in), lambda i: (i, 0)),   # x: streamed over M
                _resident((d_in, hidden_p)),                      # w1: VMEM-resident
                _resident((1, hidden_p)),                         # b1: VMEM-resident
                _resident((hidden_p, label_p)),                   # w2: VMEM-resident
            ],
            out_specs=pl.BlockSpec((tile_m, label_p), lambda i: (i, 0)),
        ),
        compiler_params=pltpu.CompilerParams(
            dimension_semantics=("parallel",),        # megacore / 2-TC sharding
            vmem_limit_bytes=_VMEM_LIMIT_BYTES,
        ),
        cost_estimate=cost,
    )(x, w1_p, b1_p, w2_p)

    # Drop the zero-padded label columns only when padding exists.
    out_flat = out if label == label_p else out[:, :label]
    decoder_out_acc = out_flat.reshape(batch, seq, label)
    decoder_out = out_flat  # == .view(batch*seq, -1)
    return decoder_out, decoder_out_acc


def _xavier_uniform(key, out_features, in_features):
    # matches torch.nn.init.xavier_uniform for a (out, in) weight
    limit = math.sqrt(6.0 / (in_features + out_features))
    return jax.random.uniform(
        key, (out_features, in_features), dtype=jnp.float32,
        minval=-limit, maxval=limit)


if __name__ == "__main__":
    # Small, shape-consistent config:
    batch = 2
    seq = 8
    rnn_hidden_dim = 16           # encoder feature = 2*rnn_hidden_dim = 32
    hidden_size = 32
    label_size = 8

    key = jax.random.PRNGKey(0)
    k_enc, k_w1, k_b1, k_w2 = jax.random.split(key, 4)

    encoder_out = jax.random.normal(
        k_enc, (batch, seq, 2 * rnn_hidden_dim), dtype=jnp.float32)

    # Deterministic parameter init mirroring the module's __init__:
    w_nonlinear = _xavier_uniform(k_w1, hidden_size, 2 * rnn_hidden_dim)
    b_limit = math.sqrt(6.0 / (hidden_size + 1))
    b_nonlinear = jax.random.uniform(
        k_b1, (hidden_size,), dtype=jnp.float32, minval=-b_limit, maxval=b_limit)
    w_linear = _xavier_uniform(k_w2, label_size, hidden_size)

    # One-time prep (transpose + pad + bf16 cast) outside the jitted hot path.
    w1_p, b1_p, w2_p = prepare_decoder_params(w_nonlinear, b_nonlinear, w_linear)

    try:
        decoder_out, decoder_out_acc = decoder_forward(
            encoder_out, w1_p, b1_p, w2_p,
            batch=batch, seq=seq, label=label_size)
    except Exception:
        # Fallback if this JAX build rejects pl.Buffered(1) on resident weights.
        decoder_out, decoder_out_acc = decoder_forward(
            encoder_out, w1_p, b1_p, w2_p,
            batch=batch, seq=seq, label=label_size,
            single_buffer_weights=False)
    jax.block_until_ready((decoder_out, decoder_out_acc))

    # Reference along the same bf16-matmul / f32-accumulate path.
    xb = encoder_out.reshape(batch * seq, -1).astype(jnp.bfloat16)
    w1b = w_nonlinear.T.astype(jnp.bfloat16)
    w2b = w_linear.T.astype(jnp.bfloat16)
    h_ref = jnp.tanh(
        jnp.dot(xb, w1b, preferred_element_type=jnp.float32) + b_nonlinear[None, :])
    ref_flat = jnp.dot(h_ref.astype(jnp.bfloat16), w2b,
                       preferred_element_type=jnp.float32)
    ref_acc = ref_flat.reshape(batch, seq, label_size)

    assert decoder_out.shape == (batch * seq, label_size)
    assert decoder_out_acc.shape == (batch, seq, label_size)
    assert jnp.allclose(decoder_out, ref_flat, atol=1e-3, rtol=1e-3)
    assert jnp.allclose(decoder_out_acc, ref_acc, atol=1e-3, rtol=1e-3)

    print("KERNEL_OK")
</pallas_src>

<mosaic_0001>
module attributes {stable_mosaic.version = 11 : i64} {
  func.func @_decoder_kernel(%arg0: i32, %arg1: memref<16x32xf32, #tpu.memory_space<vmem>>, %arg2: memref<32x128xbf16, #tpu.memory_space<vmem>>, %arg3: memref<1x128xf32, #tpu.memory_space<vmem>>, %arg4: memref<128x128xbf16, #tpu.memory_space<vmem>>, %arg5: memref<16x128xf32, #tpu.memory_space<vmem>>) attributes {dimension_semantics = [#tpu.dimension_semantics<parallel>], iteration_bounds = array<i64: 1>, scalar_prefetch = 0 : i64, scratch_operands = 0 : i64, tpu.core_type = #tpu.core_type<tc>, window_params = [{transform_indices = @transform_0, window_bounds = array<i64: 16, 32>}, {pipeline_mode = #tpu.pipeline_mode<synchronous>, transform_indices = @transform_1, window_bounds = array<i64: 32, 128>}, {pipeline_mode = #tpu.pipeline_mode<synchronous>, transform_indices = @transform_2, window_bounds = array<i64: 1, 128>}, {pipeline_mode = #tpu.pipeline_mode<synchronous>, transform_indices = @transform_3, window_bounds = array<i64: 128, 128>}, {transform_indices = @transform_4, window_bounds = array<i64: 16, 128>}]} {
    %c0 = arith.constant 0 : index
    %c0_0 = arith.constant 0 : index
    %0 = vector.load %arg1[%c0, %c0_0] : memref<16x32xf32, #tpu.memory_space<vmem>>, vector<16x32xf32>
    %1 = arith.truncf %0 : vector<16x32xf32> to vector<16x32xbf16>
    %c0_1 = arith.constant 0 : index
    %c0_2 = arith.constant 0 : index
    %2 = vector.load %arg2[%c0_1, %c0_2] : memref<32x128xbf16, #tpu.memory_space<vmem>>, vector<32x128xbf16>
    %cst = arith.constant dense<0.000000e+00> : vector<16x128xf32>
    %3 = tpu.matmul %1, %2, %cst {dimension_numbers = #tpu.dot_dimension_numbers<[1], [0], [0], [1], [0, 0, 1, 1], [], []>} : vector<16x32xbf16>, vector<32x128xbf16>, vector<16x128xf32> -> vector<16x128xf32>
    %c0_3 = arith.constant 0 : index
    %c0_4 = arith.constant 0 : index
    %4 = vector.load %arg3[%c0_3, %c0_4] : memref<1x128xf32, #tpu.memory_space<vmem>>, vector<1x128xf32>
    %5 = vector.broadcast %4 : vector<1x128xf32> to vector<16x128xf32>
    %6 = arith.addf %3, %5 : vector<16x128xf32>
    %7 = math.tanh %6 : vector<16x128xf32>
    %8 = arith.truncf %7 : vector<16x128xf32> to vector<16x128xbf16>
    %c0_5 = arith.constant 0 : index
    %c0_6 = arith.constant 0 : index
    %9 = vector.load %arg4[%c0_5, %c0_6] : memref<128x128xbf16, #tpu.memory_space<vmem>>, vector<128x128xbf16>
    %cst_7 = arith.constant dense<0.000000e+00> : vector<16x128xf32>
    %10 = tpu.matmul %8, %9, %cst_7 {dimension_numbers = #tpu.dot_dimension_numbers<[1], [0], [0], [1], [0, 0, 1, 1], [], []>} : vector<16x128xbf16>, vector<128x128xbf16>, vector<16x128xf32> -> vector<16x128xf32>
    %c0_8 = arith.constant 0 : index
    %c0_9 = arith.constant 0 : index
    %11 = vector.load %arg5[%c0_8, %c0_9] : memref<16x128xf32, #tpu.memory_space<vmem>>, vector<16x128xf32>
    tpu.vector_store %arg5[%c0_8, %c0_9], %10 {strides = array<i32>} : memref<16x128xf32, #tpu.memory_space<vmem>>, vector<16x128xf32>,
    return
  }
  func.func @transform_0(%arg0: i32) -> (i32, i32) {
    %c0_i32 = arith.constant 0 : i32
    %c0_i32_0 = arith.constant 0 : i32
    return %arg0, %c0_i32 : i32, i32
  }
  func.func @transform_1(%arg0: i32) -> (i32, i32) {
    %c0_i32 = arith.constant 0 : i32
    %c0_i32_0 = arith.constant 0 : i32
    %c0_i32_1 = arith.constant 0 : i32
    return %c0_i32, %c0_i32_0 : i32, i32
  }
  func.func @transform_2(%arg0: i32) -> (i32, i32) {
    %c0_i32 = arith.constant 0 : i32
    %c0_i32_0 = arith.constant 0 : i32
    %c0_i32_1 = arith.constant 0 : i32
    return %c0_i32, %c0_i32_0 : i32, i32
  }
  func.func @transform_3(%arg0: i32) -> (i32, i32) {
    %c0_i32 = arith.constant 0 : i32
    %c0_i32_0 = arith.constant 0 : i32
    %c0_i32_1 = arith.constant 0 : i32
    return %c0_i32, %c0_i32_0 : i32, i32
  }
  func.func @transform_4(%arg0: i32) -> (i32, i32) {
    %c0_i32 = arith.constant 0 : i32
    %c0_i32_0 = arith.constant 0 : i32
    return %arg0, %c0_i32 : i32, i32
  }
}

module attributes {stable_mosaic.version = 11 : i64} {
  func.func @_decoder_kernel(%arg0: i32, %arg1: memref<16x32xf32, #tpu.memory_space<vmem>>, %arg2: memref<32x128xbf16, #tpu.memory_space<vmem>>, %arg3: memref<1x128xf32, #tpu.memory_space<vmem>>, %arg4: memref<128x128xbf16, #tpu.memory_space<vmem>>, %arg5: memref<16x128xf32, #tpu.memory_space<vmem>>) attributes {dimension_semantics = [#tpu.dimension_semantics<parallel>], iteration_bounds = array<i64: 1>, scalar_prefetch = 0 : i64, scratch_operands = 0 : i64, tpu.core_type = #tpu.core_type<tc>, window_params = [{transform_indices = @transform_0, window_bounds = array<i64: 16, 32>}, {pipeline_mode = #tpu.pipeline_mode<synchronous>, transform_indices = @transform_1, window_bounds = array<i64: 32, 128>}, {pipeline_mode = #tpu.pipeline_mode<synchronous>, transform_indices = @transform_2, window_bounds = array<i64: 1, 128>}, {pipeline_mode = #tpu.pipeline_mode<synchronous>, transform_indices = @transform_3, window_bounds = array<i64: 128, 128>}, {transform_indices = @transform_4, window_bounds = array<i64: 16, 128>}]} {
    %c0 = arith.constant 0 : index
    %c0_0 = arith.constant 0 : index
    %0 = vector.load %arg1[%c0, %c0_0] : memref<16x32xf32, #tpu.memory_space<vmem>>, vector<16x32xf32>
    %1 = arith.truncf %0 : vector<16x32xf32> to vector<16x32xbf16>
    %c0_1 = arith.constant 0 : index
    %c0_2 = arith.constant 0 : index
    %2 = vector.load %arg2[%c0_1, %c0_2] : memref<32x128xbf16, #tpu.memory_space<vmem>>, vector<32x128xbf16>
    %cst = arith.constant dense<0.000000e+00> : vector<16x128xf32>
    %3 = tpu.matmul %1, %2, %cst {dimension_numbers = #tpu.dot_dimension_numbers<[1], [0], [0], [1], [0, 0, 1, 1], [], []>} : vector<16x32xbf16>, vector<32x128xbf16>, vector<16x128xf32> -> vector<16x128xf32>
    %c0_3 = arith.constant 0 : index
    %c0_4 = arith.constant 0 : index
    %4 = vector.load %arg3[%c0_3, %c0_4] : memref<1x128xf32, #tpu.memory_space<vmem>>, vector<1x128xf32>
    %5 = vector.broadcast %4 : vector<1x128xf32> to vector<16x128xf32>
    %6 = arith.addf %3, %5 : vector<16x128xf32>
    %7 = math.tanh %6 : vector<16x128xf32>
    %8 = arith.truncf %7 : vector<16x128xf32> to vector<16x128xbf16>
    %c0_5 = arith.constant 0 : index
    %c0_6 = arith.constant 0 : index
    %9 = vector.load %arg4[%c0_5, %c0_6] : memref<128x128xbf16, #tpu.memory_space<vmem>>, vector<128x128xbf16>
    %cst_7 = arith.constant dense<0.000000e+00> : vector<16x128xf32>
    %10 = tpu.matmul %8, %9, %cst_7 {dimension_numbers = #tpu.dot_dimension_numbers<[1], [0], [0], [1], [0, 0, 1, 1], [], []>} : vector<16x128xbf16>, vector<128x128xbf16>, vector<16x128xf32> -> vector<16x128xf32>
    %c0_8 = arith.constant 0 : index
    %c0_9 = arith.constant 0 : index
    %11 = vector.load %arg5[%c0_8, %c0_9] : memref<16x128xf32, #tpu.memory_space<vmem>>, vector<16x128xf32>
    tpu.vector_store %arg5[%c0_8, %c0_9], %10 {strides = array<i32>} : memref<16x128xf32, #tpu.memory_space<vmem>>, vector<16x128xf32>,
    return
  }
  func.func @transform_0(%arg0: i32) -> (i32, i32) {
    %c0_i32 = arith.constant 0 : i32
    %c0_i32_0 = arith.constant 0 : i32
    return %arg0, %c0_i32 : i32, i32
  }
  func.func @transform_1(%arg0: i32) -> (i32, i32) {
    %c0_i32 = arith.constant 0 : i32
    %c0_i32_0 = arith.constant 0 : i32
    %c0_i32_1 = arith.constant 0 : i32
    return %c0_i32, %c0_i32_0 : i32, i32
  }
  func.func @transform_2(%arg0: i32) -> (i32, i32) {
    %c0_i32 = arith.constant 0 : i32
    %c0_i32_0 = arith.constant 0 : i32
    %c0_i32_1 = arith.constant 0 : i32
    return %c0_i32, %c0_i32_0 : i32, i32
  }
  func.func @transform_3(%arg0: i32) -> (i32, i32) {
    %c0_i32 = arith.constant 0 : i32
    %c0_i32_0 = arith.constant 0 : i32
    %c0_i32_1 = arith.constant 0 : i32
    return %c0_i32, %c0_i32_0 : i32, i32
  }
  func.func @transform_4(%arg0: i32) -> (i32, i32) {
    %c0_i32 = arith.constant 0 : i32
    %c0_i32_0 = arith.constant 0 : i32
    return %arg0, %c0_i32 : i32, i32
  }
}

</mosaic_0001>

<llo_original>
// kernel: decoder_forward.1
$region0: #{decoder_forward.1}
  #allocation0 [shape = 'u32[]', space=smem, size = 0x4, offset = 0x4, fixed_abs, tag = 'smem constant byte address 0x4 - core index']
  #allocation1 [shape = 'u32[72,128]{1,0:T(1,128)}', space=vmem, size = 0x9000, scoped, tag = 'internal scratch']
  %s0 = inlined_call_operand.hbm [shape: f32[16,32], index: 0, kind: input, shape index: {}]
  %s1 = inlined_call_operand.hbm [shape: bf16[32,128], index: 1, kind: input, shape index: {}]
  %s2 = inlined_call_operand.vmem [shape: f32[1,128], index: 2, kind: input, shape index: {}]
  %s3 = inlined_call_operand.hbm [shape: bf16[128,128], index: 3, kind: input, shape index: {}]
  %s4 = inlined_call_operand.vmem [shape: f32[16,128], index: 4, kind: output, shape index: {}]
  %s5 = sld [smem:[#allocation0]]
  $region38: #{decoder_forward.1} parent=0
    _
  %s7 = ssub.s32 1, %s5
  %s8 = scalar_select 0, %s7, %s5
  $region1: #{decoder_forward.1} parent=0
    #allocation2 [shape = 'u8[8192]{0}', space=vmem, size = 0x2000, scoped, tag = 'input window, operand 0, single buffered']
    #allocation3 [shape = 's32[1]{0}', space=sflag, size = 0x4, scoped, tag = 'scoped memory for decoder_forward.1']
    #allocation4 [shape = 'u8[8192]{0}', space=vmem, size = 0x2000, scoped, tag = 'input window, operand 1, single buffered']
    #allocation5 [shape = 's32[1]{0}', space=sflag, size = 0x4, scoped, tag = 'scoped memory for decoder_forward.1']
    #allocation6 [shape = 'u8[32768]{0}', space=vmem, size = 0x8000, scoped, tag = 'input window, operand 3, single buffered']
    %9 = vsyncpa [#allocation3], 0
    %10 = vsyncpa [#allocation5], 0
    // Predicated region
    $region2: #{decoder_forward.1} parent=1 // pred_check
      _
    $region3: #{decoder_forward.1} parent=1 // pred_check_branch
      %12 = sbr.rel (0) target = $region5
    $region4: #{decoder_forward.1} parent=1 // pred_region
      %14 = vsyncadd [#allocation3], 0
      %s15 = sshll.u32 %s0, 4
      %s16 = int_to_ptr.hbm [resolvable:$true] %s15
      %s17 = sshll.u32 [#allocation2], 4
      %s18 = int_to_ptr.vmem [resolvable:$true] %s17
      %23 = dma.hbm_to_vmem [thread:$0]  %s16, 256, %s18, [#allocation3], 128, 128, 8
    $region5: #{decoder_forward.1} parent=1 // pred_fallthru
      _
    // Predicated region
    $region6: #{decoder_forward.1} parent=1 // pred_check
      _
    $region7: #{decoder_forward.1} parent=1 // pred_check_branch
      %25 = sbr.rel (0) target = $region9
    $region8: #{decoder_forward.1} parent=1 // pred_region
      %27 = vsyncadd [#allocation5], 0
      %s28 = sshll.u32 %s1, 4
      %s29 = int_to_ptr.hbm [resolvable:$true] %s28
      %s30 = sshll.u32 [#allocation4], 4
      %s31 = int_to_ptr.vmem [resolvable:$true] %s30
      %36 = dma.hbm_to_vmem [thread:$0]  %s29, 256, %s31, [#allocation5], 64, 64, 4
    $region9: #{decoder_forward.1} parent=1 // pred_fallthru
      _
    // Predicated region
    $region10: #{decoder_forward.1} parent=1 // pred_check
      _
    $region11: #{decoder_forward.1} parent=1 // pred_check_branch
      %38 = sbr.rel (0) target = $region13
    $region12: #{decoder_forward.1} parent=1 // pred_region
      _
    $region13: #{decoder_forward.1} parent=1 // pred_fallthru
      _
    // Predicated region
    $region14: #{decoder_forward.1} parent=1 // pred_check
      _
    $region15: #{decoder_forward.1} parent=1 // pred_check_branch
      %40 = sbr.rel (0) target = $region17
    $region16: #{decoder_forward.1} parent=1 // pred_region
      %42 = vsyncadd [#allocation5], 0
      %s43 = sshll.u32 %s3, 4
      %s44 = int_to_ptr.hbm [resolvable:$true] %s43
      %s45 = sshll.u32 [#allocation6], 4
      %s46 = int_to_ptr.vmem [resolvable:$true] %s45
      %51 = dma.hbm_to_vmem [thread:$0]  %s44, 1024, %s46, [#allocation5], 64, 64, 4
    $region17: #{decoder_forward.1} parent=1 // pred_fallthru
      _
    // Predicated region
    $region18: #{decoder_forward.1} parent=1 // pred_check
      _
    $region19: #{decoder_forward.1} parent=1 // pred_check_branch
      %53 = sbr.rel (0) target = $region21
    $region20: #{decoder_forward.1} parent=1 // pred_region
      %55 = dma.done [#allocation3], 256
    $region21: #{decoder_forward.1} parent=1 // pred_fallthru
      _
    // Predicated region
    $region22: #{decoder_forward.1} parent=1 // pred_check
      _
    $region23: #{decoder_forward.1} parent=1 // pred_check_branch
      %57 = sbr.rel (0) target = $region25
    $region24: #{decoder_forward.1} parent=1 // pred_region
      %59 = dma.done [#allocation5], 256
    $region25: #{decoder_forward.1} parent=1 // pred_fallthru
      _
    // Predicated region
    $region26: #{decoder_forward.1} parent=1 // pred_check
      _
    $region27: #{decoder_forward.1} parent=1 // pred_check_branch
      %61 = sbr.rel (0) target = $region29
    $region28: #{decoder_forward.1} parent=1 // pred_region
      %63 = dma.done [#allocation5], 1024
    $region29: #{decoder_forward.1} parent=1 // pred_fallthru
      _
    %v65 = vld [vmem:[#allocation2] sm:$0xff]
    %v66 = vld [vmem:[#allocation2 + $0x8] sm:$0xff]
    %v67 = vpack.c.bf16 %v66, %v65
    %v68 = vld [vmem:[#allocation4] sm:$0xf]
    %v69 = vld [vmem:[#allocation4 + $0x4] sm:$0xf]
    %v70 = vld [vmem:[#allocation4 + $0x8] sm:$0xf]
    %v71 = vld [vmem:[#allocation4 + $0xc] sm:$0xf]
    %v72 = vld [vmem:[%s2] sm:$0x1]
    %v74 = vperm.slane %v72, 0
    %v80 = vunpack.c.l.b16 %v68
    %v81 = vunpack.c.l.b16 %v69
    %v82 = vunpack.c.l.b16 %v70
    %v83 = vunpack.c.l.b16 %v71
    %v84 = vpack.c.b16 %v81, %v80
    %v85 = vpack.c.b16 %v83, %v82
    %vm88 = vcmask 261120
    %v90 = vsel %vm88, %v67, 0
    %92 = vmatpush.bf16.msra.mxu0 0
    %93 = vmatpush.bf16.msra.mxu0 0
    %94 = vmatpush.bf16.msra.mxu0 0
    %95 = vmatpush.bf16.msra.mxu0 0
    %96 = vmatpush.bf16.msra.mxu0 0
    %97 = vmatpush.bf16.msra.mxu0 0
    %98 = vmatpush.bf16.msra.mxu0 %v85
    %99 = vmatpush.bf16.msra.mxu0 %v84
    %100 = vmatmul.bf16.gmra.mxu0 %v90
    %v101 = vpop.f32.mrf.mxu0
    %v102 = vadd.f32 %v74, %v101
    %v103 = vpop.f32.mrf.mxu0
    %v104 = vadd.f32 %v74, %v103
    %105 = vdwg.mxu0
    %v106 = vtanh.pop %v102
    %v107 = vtanh.pop %v104
    %v108 = vpack.c.bf16 %v107, %v106
    %v109 = vld [vmem:[#allocation6] sm:$0xf]
    %v110 = vld [vmem:[#allocation6 + $0x4] sm:$0xf]
    %v111 = vld [vmem:[#allocation6 + $0x8] sm:$0xf]
    %v112 = vld [vmem:[#allocation6 + $0xc] sm:$0xf]
    %v113 = vld [vmem:[#allocation6 + $0x10] sm:$0xf]
    %v114 = vld [vmem:[#allocation6 + $0x14] sm:$0xf]
    %v115 = vld [vmem:[#allocation6 + $0x18] sm:$0xf]
    %v116 = vld [vmem:[#allocation6 + $0x1c] sm:$0xf]
    %v117 = vld [vmem:[#allocation6 + $0x20] sm:$0xf]
    %v118 = vld [vmem:[#allocation6 + $0x24] sm:$0xf]
    %v119 = vld [vmem:[#allocation6 + $0x28] sm:$0xf]
    %v120 = vld [vmem:[#allocation6 + $0x2c] sm:$0xf]
    %v121 = vld [vmem:[#allocation6 + $0x30] sm:$0xf]
    %v122 = vld [vmem:[#allocation6 + $0x34] sm:$0xf]
    %v123 = vld [vmem:[#allocation6 + $0x38] sm:$0xf]
    %v124 = vld [vmem:[#allocation6 + $0x3c] sm:$0xf]
    %v141 = vunpack.c.l.b16 %v109
    %v142 = vunpack.c.l.b16 %v110
    %v143 = vunpack.c.l.b16 %v111
    %v144 = vunpack.c.l.b16 %v112
    %v145 = vunpack.c.l.b16 %v113
    %v146 = vunpack.c.l.b16 %v114
    %v147 = vunpack.c.l.b16 %v115
    %v148 = vunpack.c.l.b16 %v116
    %v149 = vunpack.c.l.b16 %v117
    %v150 = vunpack.c.l.b16 %v118
    %v151 = vunpack.c.l.b16 %v119
    %v152 = vunpack.c.l.b16 %v120
    %v153 = vunpack.c.l.b16 %v121
    %v154 = vunpack.c.l.b16 %v122
    %v155 = vunpack.c.l.b16 %v123
    %v156 = vunpack.c.l.b16 %v124
    %v157 = vpack.c.b16 %v142, %v141
    %v158 = vpack.c.b16 %v144, %v143
    %v159 = vpack.c.b16 %v146, %v145
    %v160 = vpack.c.b16 %v148, %v147
    %v161 = vpack.c.b16 %v150, %v149
    %v162 = vpack.c.b16 %v152, %v151
    %v163 = vpack.c.b16 %v154, %v153
    %v164 = vpack.c.b16 %v156, %v155
    %173 = vmatpush.bf16.msra.mxu0 %v164
    %174 = vmatpush.bf16.msra.mxu0 %v163
    %175 = vmatpush.bf16.msra.mxu0 %v162
    %176 = vmatpush.bf16.msra.mxu0 %v161
    %177 = vmatpush.bf16.msra.mxu0 %v160
    %178 = vmatpush.bf16.msra.mxu0 %v159
    %179 = vmatpush.bf16.msra.mxu0 %v158
    %180 = vmatpush.bf16.msra.mxu0 %v157
    %181 = vmatmul.bf16.gmra.mxu0 %v108
    %v182 = vpop.f32.mrf.mxu0
    %v183 = vadd.f32 0.0, %v182
    %v184 = vpop.f32.mrf.mxu0
    %v185 = vadd.f32 0.0, %v184
    %186 = vdwg.mxu0
    %187 = vst [vmem:[%s4] sm:$0xff] %v183
    %188 = vst [vmem:[%s4 + $0x8] sm:$0xff] %v185
    // Predicated region
    $region30: #{decoder_forward.1} parent=1 // pred_check
      _
    $region31: #{decoder_forward.1} parent=1 // pred_check_branch
      %190 = sbr.rel (0) target = $region33
    $region32: #{decoder_forward.1} parent=1 // pred_region
      _
    $region33: #{decoder_forward.1} parent=1 // pred_fallthru
      _
    // Predicated region
    $region34: #{decoder_forward.1} parent=1 // pred_check
      _
    $region35: #{decoder_forward.1} parent=1 // pred_check_branch
      %192 = sbr.rel (0) target = $region37
    $region36: #{decoder_forward.1} parent=1 // pred_region
      _
    $region37: #{decoder_forward.1} parent=1 // pred_fallthru
      _
    %193 = vsyncpa [#allocation3], 1
    %194 = vsyncpa [#allocation5], 1

// kernel: decoder_forward.1
$region0: #{decoder_forward.1}
  #allocation0 [shape = 'u32[]', space=smem, size = 0x4, offset = 0x4, fixed_abs, tag = 'smem constant byte address 0x4 - core index']
  #allocation1 [shape = 'u32[72,128]{1,0:T(1,128)}', space=vmem, size = 0x9000, scoped, tag = 'internal scratch']
  %s0 = inlined_call_operand.hbm [shape: f32[16,32], index: 0, kind: input, shape index: {}]
  %s1 = inlined_call_operand.hbm [shape: bf16[32,128], index: 1, kind: input, shape index: {}]
  %s2 = inlined_call_operand.vmem [shape: f32[1,128], index: 2, kind: input, shape index: {}]
  %s3 = inlined_call_operand.hbm [shape: bf16[128,128], index: 3, kind: input, shape index: {}]
  %s4 = inlined_call_operand.vmem [shape: f32[16,128], index: 4, kind: output, shape index: {}]
  %s5 = sld [smem:[#allocation0]]
  $region38: #{decoder_forward.1} parent=0
    _
  %s7 = ssub.s32 1, %s5
  %s8 = scalar_select 0, %s7, %s5
  $region1: #{decoder_forward.1} parent=0
    #allocation2 [shape = 'u8[8192]{0}', space=vmem, size = 0x2000, scoped, tag = 'input window, operand 0, single buffered']
    #allocation3 [shape = 's32[1]{0}', space=sflag, size = 0x4, scoped, tag = 'scoped memory for decoder_forward.1']
    #allocation4 [shape = 'u8[8192]{0}', space=vmem, size = 0x2000, scoped, tag = 'input window, operand 1, single buffered']
    #allocation5 [shape = 's32[1]{0}', space=sflag, size = 0x4, scoped, tag = 'scoped memory for decoder_forward.1']
    #allocation6 [shape = 'u8[32768]{0}', space=vmem, size = 0x8000, scoped, tag = 'input window, operand 3, single buffered']
    %9 = vsyncpa [#allocation3], 0
    %10 = vsyncpa [#allocation5], 0
    // Predicated region
    $region2: #{decoder_forward.1} parent=1 // pred_check
      _
    $region3: #{decoder_forward.1} parent=1 // pred_check_branch
      %12 = sbr.rel (0) target = $region5
    $region4: #{decoder_forward.1} parent=1 // pred_region
      %14 = vsyncadd [#allocation3], 0
      %s15 = sshll.u32 %s0, 4
      %s16 = int_to_ptr.hbm [resolvable:$true] %s15
      %s17 = sshll.u32 [#allocation2], 4
      %s18 = int_to_ptr.vmem [resolvable:$true] %s17
      %23 = dma.hbm_to_vmem [thread:$0]  %s16, 256, %s18, [#allocation3], 128, 128, 8
    $region5: #{decoder_forward.1} parent=1 // pred_fallthru
      _
    // Predicated region
    $region6: #{decoder_forward.1} parent=1 // pred_check
      _
    $region7: #{decoder_forward.1} parent=1 // pred_check_branch
      %25 = sbr.rel (0) target = $region9
    $region8: #{decoder_forward.1} parent=1 // pred_region
      %27 = vsyncadd [#allocation5], 0
      %s28 = sshll.u32 %s1, 4
      %s29 = int_to_ptr.hbm [resolvable:$true] %s28
      %s30 = sshll.u32 [#allocation4], 4
      %s31 = int_to_ptr.vmem [resolvable:$true] %s30
      %36 = dma.hbm_to_vmem [thread:$0]  %s29, 256, %s31, [#allocation5], 64, 64, 4
    $region9: #{decoder_forward.1} parent=1 // pred_fallthru
      _
    // Predicated region
    $region10: #{decoder_forward.1} parent=1 // pred_check
      _
    $region11: #{decoder_forward.1} parent=1 // pred_check_branch
      %38 = sbr.rel (0) target = $region13
    $region12: #{decoder_forward.1} parent=1 // pred_region
      _
    $region13: #{decoder_forward.1} parent=1 // pred_fallthru
      _
    // Predicated region
    $region14: #{decoder_forward.1} parent=1 // pred_check
      _
    $region15: #{decoder_forward.1} parent=1 // pred_check_branch
      %40 = sbr.rel (0) target = $region17
    $region16: #{decoder_forward.1} parent=1 // pred_region
      %42 = vsyncadd [#allocation5], 0
      %s43 = sshll.u32 %s3, 4
      %s44 = int_to_ptr.hbm [resolvable:$true] %s43
      %s45 = sshll.u32 [#allocation6], 4
      %s46 = int_to_ptr.vmem [resolvable:$true] %s45
      %51 = dma.hbm_to_vmem [thread:$0]  %s44, 1024, %s46, [#allocation5], 64, 64, 4
    $region17: #{decoder_forward.1} parent=1 // pred_fallthru
      _
    // Predicated region
    $region18: #{decoder_forward.1} parent=1 // pred_check
      _
    $region19: #{decoder_forward.1} parent=1 // pred_check_branch
      %53 = sbr.rel (0) target = $region21
    $region20: #{decoder_forward.1} parent=1 // pred_region
      %55 = dma.done [#allocation3], 256
    $region21: #{decoder_forward.1} parent=1 // pred_fallthru
      _
    // Predicated region
    $region22: #{decoder_forward.1} parent=1 // pred_check
      _
    $region23: #{decoder_forward.1} parent=1 // pred_check_branch
      %57 = sbr.rel (0) target = $region25
    $region24: #{decoder_forward.1} parent=1 // pred_region
      %59 = dma.done [#allocation5], 256
    $region25: #{decoder_forward.1} parent=1 // pred_fallthru
      _
    // Predicated region
    $region26: #{decoder_forward.1} parent=1 // pred_check
      _
    $region27: #{decoder_forward.1} parent=1 // pred_check_branch
      %61 = sbr.rel (0) target = $region29
    $region28: #{decoder_forward.1} parent=1 // pred_region
      %63 = dma.done [#allocation5], 1024
    $region29: #{decoder_forward.1} parent=1 // pred_fallthru
      _
    %v65 = vld [vmem:[#allocation2] sm:$0xff]
    %v66 = vld [vmem:[#allocation2 + $0x8] sm:$0xff]
    %v67 = vpack.c.bf16 %v66, %v65
    %v68 = vld [vmem:[#allocation4] sm:$0xf]
    %v69 = vld [vmem:[#allocation4 + $0x4] sm:$0xf]
    %v70 = vld [vmem:[#allocation4 + $0x8] sm:$0xf]
    %v71 = vld [vmem:[#allocation4 + $0xc] sm:$0xf]
    %v72 = vld [vmem:[%s2] sm:$0x1]
    %v74 = vperm.slane %v72, 0
    %v80 = vunpack.c.l.b16 %v68
    %v81 = vunpack.c.l.b16 %v69
    %v82 = vunpack.c.l.b16 %v70
    %v83 = vunpack.c.l.b16 %v71
    %v84 = vpack.c.b16 %v81, %v80
    %v85 = vpack.c.b16 %v83, %v82
    %vm88 = vcmask 261120
    %v90 = vsel %vm88, %v67, 0
    %92 = vmatpush.bf16.msra.mxu0 0
    %93 = vmatpush.bf16.msra.mxu0 0
    %94 = vmatpush.bf16.msra.mxu0 0
    %95 = vmatpush.bf16.msra.mxu0 0
    %96 = vmatpush.bf16.msra.mxu0 0
    %97 = vmatpush.bf16.msra.mxu0 0
    %98 = vmatpush.bf16.msra.mxu0 %v85
    %99 = vmatpush.bf16.msra.mxu0 %v84
    %100 = vmatmul.bf16.gmra.mxu0 %v90
    %v101 = vpop.f32.mrf.mxu0
    %v102 = vadd.f32 %v74, %v101
    %v103 = vpop.f32.mrf.mxu0
    %v104 = vadd.f32 %v74, %v103
    %105 = vdwg.mxu0
    %v106 = vtanh.pop %v102
    %v107 = vtanh.pop %v104
    %v108 = vpack.c.bf16 %v107, %v106
    %v109 = vld [vmem:[#allocation6] sm:$0xf]
    %v110 = vld [vmem:[#allocation6 + $0x4] sm:$0xf]
    %v111 = vld [vmem:[#allocation6 + $0x8] sm:$0xf]
    %v112 = vld [vmem:[#allocation6 + $0xc] sm:$0xf]
    %v113 = vld [vmem:[#allocation6 + $0x10] sm:$0xf]
    %v114 = vld [vmem:[#allocation6 + $0x14] sm:$0xf]
    %v115 = vld [vmem:[#allocation6 + $0x18] sm:$0xf]
    %v116 = vld [vmem:[#allocation6 + $0x1c] sm:$0xf]
    %v117 = vld [vmem:[#allocation6 + $0x20] sm:$0xf]
    %v118 = vld [vmem:[#allocation6 + $0x24] sm:$0xf]
    %v119 = vld [vmem:[#allocation6 + $0x28] sm:$0xf]
    %v120 = vld [vmem:[#allocation6 + $0x2c] sm:$0xf]
    %v121 = vld [vmem:[#allocation6 + $0x30] sm:$0xf]
    %v122 = vld [vmem:[#allocation6 + $0x34] sm:$0xf]
    %v123 = vld [vmem:[#allocation6 + $0x38] sm:$0xf]
    %v124 = vld [vmem:[#allocation6 + $0x3c] sm:$0xf]
    %v141 = vunpack.c.l.b16 %v109
    %v142 = vunpack.c.l.b16 %v110
    %v143 = vunpack.c.l.b16 %v111
    %v144 = vunpack.c.l.b16 %v112
    %v145 = vunpack.c.l.b16 %v113
    %v146 = vunpack.c.l.b16 %v114
    %v147 = vunpack.c.l.b16 %v115
    %v148 = vunpack.c.l.b16 %v116
    %v149 = vunpack.c.l.b16 %v117
    %v150 = vunpack.c.l.b16 %v118
    %v151 = vunpack.c.l.b16 %v119
    %v152 = vunpack.c.l.b16 %v120
    %v153 = vunpack.c.l.b16 %v121
    %v154 = vunpack.c.l.b16 %v122
    %v155 = vunpack.c.l.b16 %v123
    %v156 = vunpack.c.l.b16 %v124
    %v157 = vpack.c.b16 %v142, %v141
    %v158 = vpack.c.b16 %v144, %v143
    %v159 = vpack.c.b16 %v146, %v145
    %v160 = vpack.c.b16 %v148, %v147
    %v161 = vpack.c.b16 %v150, %v149
    %v162 = vpack.c.b16 %v152, %v151
    %v163 = vpack.c.b16 %v154, %v153
    %v164 = vpack.c.b16 %v156, %v155
    %173 = vmatpush.bf16.msra.mxu0 %v164
    %174 = vmatpush.bf16.msra.mxu0 %v163
    %175 = vmatpush.bf16.msra.mxu0 %v162
    %176 = vmatpush.bf16.msra.mxu0 %v161
    %177 = vmatpush.bf16.msra.mxu0 %v160
    %178 = vmatpush.bf16.msra.mxu0 %v159
    %179 = vmatpush.bf16.msra.mxu0 %v158
    %180 = vmatpush.bf16.msra.mxu0 %v157
    %181 = vmatmul.bf16.gmra.mxu0 %v108
    %v182 = vpop.f32.mrf.mxu0
    %v183 = vadd.f32 0.0, %v182
    %v184 = vpop.f32.mrf.mxu0
    %v185 = vadd.f32 0.0, %v184
    %186 = vdwg.mxu0
    %187 = vst [vmem:[%s4] sm:$0xff] %v183
    %188 = vst [vmem:[%s4 + $0x8] sm:$0xff] %v185
    // Predicated region
    $region30: #{decoder_forward.1} parent=1 // pred_check
      _
    $region31: #{decoder_forward.1} parent=1 // pred_check_branch
      %190 = sbr.rel (0) target = $region33
    $region32: #{decoder_forward.1} parent=1 // pred_region
      _
    $region33: #{decoder_forward.1} parent=1 // pred_fallthru
      _
    // Predicated region
    $region34: #{decoder_forward.1} parent=1 // pred_check
      _
    $region35: #{decoder_forward.1} parent=1 // pred_check_branch
      %192 = sbr.rel (0) target = $region37
    $region36: #{decoder_forward.1} parent=1 // pred_region
      _
    $region37: #{decoder_forward.1} parent=1 // pred_fallthru
      _
    %193 = vsyncpa [#allocation3], 1
    %194 = vsyncpa [#allocation5], 1

</llo_original>
